<compile_context>
chip_gen: v7x
topology: tpu7x:2x2x1
jax: 0.10.0
libtpu: 0.0.40
codegen_flags: <defaults>
</compile_context>

<pallas_src>
import jax
import jax.numpy as jnp
from jax.experimental import pallas as pl
from jax.experimental.pallas import tpu as pltpu

_LANE = 128
_SUBLANE = 8
_SMALL_MAX_NP = 512     # padded node counts up to this use the single-tile (block-diag) path
_ROW_TARGET = 256       # target flattened-row tile (MXU height) for the small-graph path


def _round_up(x, m):
    return (x + m - 1) // m * m


def _vmem_capacity_bytes():
    try:
        return int(pltpu.get_tpu_info().vmem_capacity_bytes)
    except Exception:
        return 64 * 1024 * 1024          # conservative default (v7x per-TensorCore)


def _vmem_limit_bytes(per_step_bytes):
    cap = _vmem_capacity_bytes()
    want = int(per_step_bytes * 1.5) + (8 << 20)
    return max(32 << 20, min(want, int(cap * 0.9)))


def _resident_spec(shape):
    """Weights/biases: constant index_map (VMEM-resident), single-buffered."""
    return pl.BlockSpec(shape, lambda *_: (0, 0), pipeline_mode=pl.Buffered(1))


def _pad2(w, shape, dtype):
    return jnp.zeros(shape, dtype).at[: w.shape[0], : w.shape[1]].set(w.astype(dtype))


# ---------------------------------------------------------------------------
# Kernels
# ---------------------------------------------------------------------------
def _gin_small_kernel(sw_ref, a_ref, x_ref, w1_ref, b1_ref, w2_ref, b2_ref, o_ref):
    """Fused GIN layer for graphs whose aggregation fits a single tile.

    One grid step handles TB graphs packed block-diagonally:
      sw_ref : (1, 1)  f32  SMEM  -- (1 + eps), exact f32 (never bf16-rounded)
      a_ref  : (R, R)  bf16       -- block-diagonal adjacency, R = TB * padded_N
      x_ref  : (R, Fp) bf16       -- flattened node features (lane-dense)
      w*_ref : bf16 weights / f32 biases, VMEM-resident, single-buffered
      o_ref  : (R, Hp) bf16|f32
    """
    x = x_ref[...]
    # Aggregation: A @ h on the MXU (bf16 operands, f32 acc) + (1+eps)*h on the VPU.
    agg = jnp.dot(a_ref[...], x, preferred_element_type=jnp.float32)
    agg = agg + sw_ref[0, 0] * x.astype(jnp.float32)
    # Two-layer MLP, bf16 operands / f32 accumulation; ReLU between and after.
    h1 = jnp.dot(agg.astype(jnp.bfloat16), w1_ref[...], preferred_element_type=jnp.float32)
    h1 = jnp.maximum(h1 + b1_ref[...], 0.0)
    h2 = jnp.dot(h1.astype(jnp.bfloat16), w2_ref[...], preferred_element_type=jnp.float32)
    o_ref[...] = jnp.maximum(h2 + b2_ref[...], 0.0).astype(o_ref.dtype)


def _gin_tiled_kernel(sw_ref, a_ref, x_ref, w1_ref, b1_ref, w2_ref, b2_ref, o_ref, acc_ref):
    """Fused GIN layer for large graphs.

    Grid = (batch, node_tile, k_tile), K innermost / "arbitrary"; TN == TK.
      a_ref : (TN, TK) bf16 adjacency tile,  x_ref : (TK, Fp) bf16 feature tile,
      acc_ref : (TN, Fp) f32 scratch accumulator (written directly at k == 0).
    """
    i = pl.program_id(1)
    k = pl.program_id(2)
    x = x_ref[...]
    part = jnp.dot(a_ref[...], x, preferred_element_type=jnp.float32)

    @pl.when(k == 0)
    def _():
        acc_ref[...] = part                 # direct write: no zero-init round trip

    @pl.when(k != 0)
    def _():
        acc_ref[...] += part

    @pl.when(k == i)                        # diagonal tile: exact f32 (1+eps)*h self term
    def _():
        acc_ref[...] += sw_ref[0, 0] * x.astype(jnp.float32)

    @pl.when(k == pl.num_programs(2) - 1)
    def _():
        h1 = jnp.dot(acc_ref[...].astype(jnp.bfloat16), w1_ref[...],
                     preferred_element_type=jnp.float32)
        h1 = jnp.maximum(h1 + b1_ref[...], 0.0)
        h2 = jnp.dot(h1.astype(jnp.bfloat16), w2_ref[...],
                     preferred_element_type=jnp.float32)
        o_ref[...] = jnp.maximum(h2 + b2_ref[...], 0.0).astype(o_ref.dtype)


# ---------------------------------------------------------------------------
# pallas_call wrappers
# ---------------------------------------------------------------------------
def _gin_layer_small(sw, a_blk, x2d, w1, b1, w2, b2, *, row_tile, out_dtype):
    rows, f_p = x2d.shape
    h_p = w1.shape[1]
    g = rows // row_tile
    ob = 2 if out_dtype == jnp.bfloat16 else 4
    per_step = (2 * (row_tile * row_tile * 2 + row_tile * f_p * 2 + row_tile * h_p * ob)
                + f_p * h_p * 2 + h_p * h_p * 2 + 2 * h_p * 4)
    return pl.pallas_call(
        _gin_small_kernel,
        out_shape=jax.ShapeDtypeStruct((rows, h_p), out_dtype),
        grid_spec=pltpu.PrefetchScalarGridSpec(
            num_scalar_prefetch=0,
            grid=(g,),
            in_specs=[
                pl.BlockSpec(memory_space=pltpu.MemorySpace.SMEM),      # (1+eps) scalar
                pl.BlockSpec((row_tile, row_tile), lambda i: (i, 0)),   # block-diag A
                pl.BlockSpec((row_tile, f_p), lambda i: (i, 0)),        # X rows
                _resident_spec((f_p, h_p)),                             # W1 (bf16, resident)
                _resident_spec((1, h_p)),                               # b1
                _resident_spec((h_p, h_p)),                             # W2
                _resident_spec((1, h_p)),                               # b2
            ],
            out_specs=pl.BlockSpec((row_tile, h_p), lambda i: (i, 0)),
        ),
        compiler_params=pltpu.CompilerParams(
            dimension_semantics=("parallel",),
            vmem_limit_bytes=_vmem_limit_bytes(per_step),
        ),
    )(sw, a_blk, x2d, w1, b1, w2, b2)


def _gin_layer_tiled(sw, a3, x3, w1, b1, w2, b2, *, tile_n, out_dtype):
    bsz, n_p, _ = a3.shape
    f_p = x3.shape[-1]
    h_p = w1.shape[1]
    nt = n_p // tile_n
    ob = 2 if out_dtype == jnp.bfloat16 else 4
    per_step = (2 * (tile_n * tile_n * 2 + tile_n * f_p * 2 + tile_n * h_p * ob)
                + tile_n * f_p * 4 + f_p * h_p * 2 + h_p * h_p * 2 + 2 * h_p * 4)
    return pl.pallas_call(
        _gin_tiled_kernel,
        out_shape=jax.ShapeDtypeStruct((bsz, n_p, h_p), out_dtype),
        grid_spec=pltpu.PrefetchScalarGridSpec(
            num_scalar_prefetch=0,
            grid=(bsz, nt, nt),
            in_specs=[
                pl.BlockSpec(memory_space=pltpu.MemorySpace.SMEM),
                pl.BlockSpec((pl.Squeezed(), tile_n, tile_n), lambda b, i, k: (b, i, k)),
                pl.BlockSpec((pl.Squeezed(), tile_n, f_p), lambda b, i, k: (b, k, 0)),
                _resident_spec((f_p, h_p)),
                _resident_spec((1, h_p)),
                _resident_spec((h_p, h_p)),
                _resident_spec((1, h_p)),
            ],
            out_specs=pl.BlockSpec((pl.Squeezed(), tile_n, h_p), lambda b, i, k: (b, i, 0)),
            scratch_shapes=[pltpu.VMEM((tile_n, f_p), jnp.float32)],
        ),
        compiler_params=pltpu.CompilerParams(
            dimension_semantics=("parallel", "parallel", "arbitrary"),
            vmem_limit_bytes=_vmem_limit_bytes(per_step),
        ),
    )(sw, a3, x3, w1, b1, w2, b2)


# ---------------------------------------------------------------------------
# Forward pass
# ---------------------------------------------------------------------------
def gin_forward(x, a, params, eps):
    """Full GIN forward (dense adjacency).

    x : [B, N, F] f32,  a : [B, N, N] (0/1) f32,
    params[i] = (w1 [in,out], b1 [out], w2 [out,out], b2 [out]).
    """
    bsz, n, f0 = x.shape
    sw = jnp.asarray(1.0 + eps, jnp.float32).reshape(1, 1)   # exact f32 (1+eps)
    n_p8 = _round_up(max(n, _SUBLANE), _SUBLANE)
    f_p = _round_up(f0, _LANE)
    n_layers = len(params)

    def pad_layer(w1, b1, w2, b2, f_p_in):
        h_out = w1.shape[1]
        h_p = _round_up(h_out, _LANE)
        w1_p = _pad2(w1, (f_p_in, h_p), jnp.bfloat16)
        b1_p = _pad2(b1.reshape(1, -1), (1, h_p), jnp.float32)
        w2_p = _pad2(w2, (h_p, h_p), jnp.bfloat16)
        b2_p = _pad2(b2.reshape(1, -1), (1, h_p), jnp.float32)
        return w1_p, b1_p, w2_p, b2_p, h_out, h_p

    if n_p8 <= _SMALL_MAX_NP:
        # --------- small-graph path: block-diagonal packing, flattened rows ---------
        tb = max(1, min(bsz, _ROW_TARGET // n_p8))
        g = pl.cdiv(bsz, tb)
        if g == 1 and bsz >= 2:            # >= 2 parallel grid steps for v7x's 2 TensorCores
            tb = (bsz + 1) // 2
            g = pl.cdiv(bsz, tb)
        bp = g * tb
        r = tb * n_p8

        # Padded bf16 adjacency built directly (no f32 intermediate, no diagonal fold).
        a_pad = jnp.zeros((bp, n_p8, n_p8), jnp.bfloat16).at[:bsz, :n, :n].set(
            a.astype(jnp.bfloat16))
        # Block-diagonalize TB graphs per grid step: one (R,R)@(R,Fp) MXU matmul
        # instead of TB tiny batched matmuls (no contraction -> exact in bf16).
        eye = jnp.eye(tb, dtype=jnp.bfloat16)
        a_blk = jnp.einsum("gtij,ts->gtisj",
                           a_pad.reshape(g, tb, n_p8, n_p8), eye).reshape(g * r, r)

        h = jnp.zeros((bp, n_p8, f_p), jnp.bfloat16).at[:bsz, :n, :f0].set(
            x.astype(jnp.bfloat16)).reshape(bp * n_p8, f_p)

        f_p_cur = f_p
        h_out = f0
        for li, (w1, b1, w2, b2) in enumerate(params):
            w1_p, b1_p, w2_p, b2_p, h_out, h_p = pad_layer(w1, b1, w2, b2, f_p_cur)
            out_dtype = jnp.float32 if li == n_layers - 1 else jnp.bfloat16
            h = _gin_layer_small(sw, a_blk, h, w1_p, b1_p, w2_p, b2_p,
                                 row_tile=r, out_dtype=out_dtype)
            f_p_cur = h_p                  # stay padded between layers (no slice/re-pad)
        return h.reshape(bp, n_p8, f_p_cur)[:bsz, :n, :h_out].astype(jnp.float32)

    # --------- large-graph path: (batch, node-tile, k-tile) grid ---------
    tile_n = 512 if _vmem_capacity_bytes() >= (100 << 20) else 256   # v5e/v6e vs v7x
    n_p = _round_up(n, tile_n)
    a_pad = jnp.zeros((bsz, n_p, n_p), jnp.bfloat16).at[:, :n, :n].set(
        a.astype(jnp.bfloat16))
    h = jnp.zeros((bsz, n_p, f_p), jnp.bfloat16).at[:, :n, :f0].set(
        x.astype(jnp.bfloat16))

    f_p_cur = f_p
    h_out = f0
    for li, (w1, b1, w2, b2) in enumerate(params):
        w1_p, b1_p, w2_p, b2_p, h_out, h_p = pad_layer(w1, b1, w2, b2, f_p_cur)
        out_dtype = jnp.float32 if li == n_layers - 1 else jnp.bfloat16
        h = _gin_layer_tiled(sw, a_pad, h, w1_p, b1_p, w2_p, b2_p,
                             tile_n=tile_n, out_dtype=out_dtype)
        f_p_cur = h_p
    return h[:, :n, :h_out].astype(jnp.float32)


# ---------------------------------------------------------------------------
# Reference / params / demo
# ---------------------------------------------------------------------------
def gin_reference(x, a, params, eps):
    """Plain-JAX f32 reference with the exact PyTorch-module semantics."""
    h = x
    for (w1, b1, w2, b2) in params:
        agg = jnp.einsum("bij,bjf->bif", a, h, precision="highest") + (1.0 + eps) * h
        h1 = jnp.maximum(jnp.einsum("bnf,fh->bnh", agg, w1, precision="highest") + b1, 0.0)
        h = jnp.maximum(jnp.einsum("bnh,hk->bnk", h1, w2, precision="highest") + b2, 0.0)
    return h


def init_mlp_params(key, in_dim, out_dim):
    """Deterministic 2-layer MLP params (PyTorch-Linear-like uniform init)."""
    k1, k2, k3, k4 = jax.random.split(key, 4)
    lim1 = 1.0 / jnp.sqrt(in_dim)
    lim2 = 1.0 / jnp.sqrt(out_dim)
    w1 = jax.random.uniform(k1, (in_dim, out_dim), jnp.float32, -lim1, lim1)
    b1 = jax.random.uniform(k2, (out_dim,), jnp.float32, -lim1, lim1)
    w2 = jax.random.uniform(k3, (out_dim, out_dim), jnp.float32, -lim2, lim2)
    b2 = jax.random.uniform(k4, (out_dim,), jnp.float32, -lim2, lim2)
    return w1, b1, w2, b2


if __name__ == "__main__":
    key = jax.random.PRNGKey(0)
    ks = jax.random.split(key, 8)
    eps = 0.0                              # GIN default (train_eps parameter starts at 0)

    # TODO(synk): sparse COO adjacency construction (dense=False path) has no clean
    # Pallas equivalent; the dense-adjacency (dense=True) semantics are implemented.

    # --- Case 1: tiny graphs -> block-diagonal small-graph path, 2 chained layers ---
    B, N, F, H = 2, 8, 16, 32              # batch, nodes, feature_size, graph_embedding_size
    X = jax.random.normal(ks[0], (B, N, F), jnp.float32)
    A = (jax.random.uniform(ks[1], (B, N, N)) > 0.5).astype(jnp.float32)
    params = [init_mlp_params(ks[2], F, H), init_mlp_params(ks[3], H, H)]

    out = jax.block_until_ready(gin_forward(X, A, params, eps))
    assert out.shape == (B, N, H)
    ref = gin_reference(X, A, params, eps)
    rel = float(jnp.max(jnp.abs(out - ref)) / jnp.maximum(1.0, jnp.max(jnp.abs(ref))))
    assert rel < 7.5e-2, f"small-path mismatch vs f32 reference: {rel}"

    # --- Case 2: larger graph -> tiled multi-(node,k)-tile path, single layer ---
    N2 = 640
    X2 = jax.random.normal(ks[4], (B, N2, F), jnp.float32)
    A2 = (jax.random.uniform(ks[5], (B, N2, N2)) > 0.5).astype(jnp.float32)
    params2 = [init_mlp_params(ks[6], F, H)]

    out2 = jax.block_until_ready(gin_forward(X2, A2, params2, eps))
    assert out2.shape == (B, N2, H)
    ref2 = gin_reference(X2, A2, params2, eps)
    rel2 = float(jnp.max(jnp.abs(out2 - ref2)) / jnp.maximum(1.0, jnp.max(jnp.abs(ref2))))
    assert rel2 < 7.5e-2, f"tiled-path mismatch vs f32 reference: {rel2}"

    print("KERNEL_OK")
</pallas_src>

<mosaic_0001>
module attributes {stable_mosaic.version = 11 : i64} {
  func.func @_gin_small_kernel(%arg0: i32, %arg1: memref<1x1xf32, #tpu.memory_space<smem>>, %arg2: memref<8x8xbf16, #tpu.memory_space<vmem>>, %arg3: memref<8x128xbf16, #tpu.memory_space<vmem>>, %arg4: memref<128x128xbf16, #tpu.memory_space<vmem>>, %arg5: memref<1x128xf32, #tpu.memory_space<vmem>>, %arg6: memref<128x128xbf16, #tpu.memory_space<vmem>>, %arg7: memref<1x128xf32, #tpu.memory_space<vmem>>, %arg8: memref<8x128xbf16, #tpu.memory_space<vmem>>) attributes {dimension_semantics = [#tpu.dimension_semantics<parallel>], iteration_bounds = array<i64: 2>, scalar_prefetch = 0 : i64, scratch_operands = 0 : i64, tpu.core_type = #tpu.core_type<tc>, window_params = [{transform_indices = @transform_0, window_bounds = array<i64: 1, 1>}, {transform_indices = @transform_1, window_bounds = array<i64: 8, 8>}, {transform_indices = @transform_2, window_bounds = array<i64: 8, 128>}, {pipeline_mode = #tpu.pipeline_mode<synchronous>, transform_indices = @transform_3, window_bounds = array<i64: 128, 128>}, {pipeline_mode = #tpu.pipeline_mode<synchronous>, transform_indices = @transform_4, window_bounds = array<i64: 1, 128>}, {pipeline_mode = #tpu.pipeline_mode<synchronous>, transform_indices = @transform_5, window_bounds = array<i64: 128, 128>}, {pipeline_mode = #tpu.pipeline_mode<synchronous>, transform_indices = @transform_6, window_bounds = array<i64: 1, 128>}, {transform_indices = @transform_7, window_bounds = array<i64: 8, 128>}]} {
    %c0 = arith.constant 0 : index
    %c0_0 = arith.constant 0 : index
    %0 = vector.load %arg3[%c0, %c0_0] : memref<8x128xbf16, #tpu.memory_space<vmem>>, vector<8x128xbf16>
    %c0_1 = arith.constant 0 : index
    %c0_2 = arith.constant 0 : index
    %1 = vector.load %arg2[%c0_1, %c0_2] : memref<8x8xbf16, #tpu.memory_space<vmem>>, vector<8x8xbf16>
    %cst = arith.constant dense<0.000000e+00> : vector<8x128xf32>
    %2 = tpu.matmul %1, %0, %cst {dimension_numbers = #tpu.dot_dimension_numbers<[1], [0], [0], [1], [0, 0, 1, 1], [], []>} : vector<8x8xbf16>, vector<8x128xbf16>, vector<8x128xf32> -> vector<8x128xf32>
    %c0_3 = arith.constant 0 : index
    %c0_4 = arith.constant 0 : index
    %3 = memref.load %arg1[%c0_3, %c0_4] : memref<1x1xf32, #tpu.memory_space<smem>>
    %4 = arith.extf %0 : vector<8x128xbf16> to vector<8x128xf32>
    %5 = vector.broadcast %3 : f32 to vector<8x128xf32>
    %6 = arith.mulf %5, %4 : vector<8x128xf32>
    %7 = arith.addf %2, %6 : vector<8x128xf32>
    %8 = arith.truncf %7 : vector<8x128xf32> to vector<8x128xbf16>
    %c0_5 = arith.constant 0 : index
    %c0_6 = arith.constant 0 : index
    %9 = vector.load %arg4[%c0_5, %c0_6] : memref<128x128xbf16, #tpu.memory_space<vmem>>, vector<128x128xbf16>
    %cst_7 = arith.constant dense<0.000000e+00> : vector<8x128xf32>
    %10 = tpu.matmul %8, %9, %cst_7 {dimension_numbers = #tpu.dot_dimension_numbers<[1], [0], [0], [1], [0, 0, 1, 1], [], []>} : vector<8x128xbf16>, vector<128x128xbf16>, vector<8x128xf32> -> vector<8x128xf32>
    %c0_8 = arith.constant 0 : index
    %c0_9 = arith.constant 0 : index
    %11 = vector.load %arg5[%c0_8, %c0_9] : memref<1x128xf32, #tpu.memory_space<vmem>>, vector<1x128xf32>
    %12 = vector.broadcast %11 : vector<1x128xf32> to vector<8x128xf32>
    %13 = arith.addf %10, %12 : vector<8x128xf32>
    %cst_10 = arith.constant 0.000000e+00 : f32
    %14 = vector.broadcast %cst_10 : f32 to vector<8x128xf32>
    %15 = arith.maximumf %13, %14 : vector<8x128xf32>
    %16 = arith.truncf %15 : vector<8x128xf32> to vector<8x128xbf16>
    %c0_11 = arith.constant 0 : index
    %c0_12 = arith.constant 0 : index
    %17 = vector.load %arg6[%c0_11, %c0_12] : memref<128x128xbf16, #tpu.memory_space<vmem>>, vector<128x128xbf16>
    %cst_13 = arith.constant dense<0.000000e+00> : vector<8x128xf32>
    %18 = tpu.matmul %16, %17, %cst_13 {dimension_numbers = #tpu.dot_dimension_numbers<[1], [0], [0], [1], [0, 0, 1, 1], [], []>} : vector<8x128xbf16>, vector<128x128xbf16>, vector<8x128xf32> -> vector<8x128xf32>
    %c0_14 = arith.constant 0 : index
    %c0_15 = arith.constant 0 : index
    %19 = vector.load %arg7[%c0_14, %c0_15] : memref<1x128xf32, #tpu.memory_space<vmem>>, vector<1x128xf32>
    %20 = vector.broadcast %19 : vector<1x128xf32> to vector<8x128xf32>
    %21 = arith.addf %18, %20 : vector<8x128xf32>
    %cst_16 = arith.constant 0.000000e+00 : f32
    %22 = vector.broadcast %cst_16 : f32 to vector<8x128xf32>
    %23 = arith.maximumf %21, %22 : vector<8x128xf32>
    %24 = arith.truncf %23 : vector<8x128xf32> to vector<8x128xbf16>
    %c0_17 = arith.constant 0 : index
    %c0_18 = arith.constant 0 : index
    %25 = vector.load %arg8[%c0_17, %c0_18] : memref<8x128xbf16, #tpu.memory_space<vmem>>, vector<8x128xbf16>
    tpu.vector_store %arg8[%c0_17, %c0_18], %24 {strides = array<i32>} : memref<8x128xbf16, #tpu.memory_space<vmem>>, vector<8x128xbf16>,
    return
  }
  func.func @transform_0(%arg0: i32) -> (i32, i32) {
    %c0_i32 = arith.constant 0 : i32
    %c0_i32_0 = arith.constant 0 : i32
    %c0_i32_1 = arith.constant 0 : i32
    return %c0_i32, %c0_i32_0 : i32, i32
  }
  func.func @transform_1(%arg0: i32) -> (i32, i32) {
    %c0_i32 = arith.constant 0 : i32
    %c0_i32_0 = arith.constant 0 : i32
    return %arg0, %c0_i32 : i32, i32
  }
  func.func @transform_2(%arg0: i32) -> (i32, i32) {
    %c0_i32 = arith.constant 0 : i32
    %c0_i32_0 = arith.constant 0 : i32
    return %arg0, %c0_i32 : i32, i32
  }
  func.func @transform_3(%arg0: i32) -> (i32, i32) {
    %c0_i32 = arith.constant 0 : i32
    %c0_i32_0 = arith.constant 0 : i32
    %c0_i32_1 = arith.constant 0 : i32
    return %c0_i32, %c0_i32_0 : i32, i32
  }
  func.func @transform_4(%arg0: i32) -> (i32, i32) {
    %c0_i32 = arith.constant 0 : i32
    %c0_i32_0 = arith.constant 0 : i32
    %c0_i32_1 = arith.constant 0 : i32
    return %c0_i32, %c0_i32_0 : i32, i32
  }
  func.func @transform_5(%arg0: i32) -> (i32, i32) {
    %c0_i32 = arith.constant 0 : i32
    %c0_i32_0 = arith.constant 0 : i32
    %c0_i32_1 = arith.constant 0 : i32
    return %c0_i32, %c0_i32_0 : i32, i32
  }
  func.func @transform_6(%arg0: i32) -> (i32, i32) {
    %c0_i32 = arith.constant 0 : i32
    %c0_i32_0 = arith.constant 0 : i32
    %c0_i32_1 = arith.constant 0 : i32
    return %c0_i32, %c0_i32_0 : i32, i32
  }
  func.func @transform_7(%arg0: i32) -> (i32, i32) {
    %c0_i32 = arith.constant 0 : i32
    %c0_i32_0 = arith.constant 0 : i32
    return %arg0, %c0_i32 : i32, i32
  }
}

</mosaic_0001>

<llo_original>
// kernel: tpu_custom_call.1
$region0: #{tpu_custom_call.1}
  #allocation0 [shape = 'u32[]', space=smem, size = 0x4, offset = 0x4, fixed_abs, tag = 'smem constant byte address 0x4 - core index']
  #allocation1 [shape = 'u32[144,128]{1,0:T(1,128)}', space=vmem, size = 0x12000, scoped, tag = 'internal scratch']
  #allocation2 [shape = 'f32[1,1]{1,0:T(1,128)S(6)}', space=smem, size = 0x200, scoped, tag = 'scoped memory for tpu_custom_call.1']
  %s0 = inlined_call_operand.<no memory space> [shape: f32[1,1], index: 0, kind: input, shape index: {}]
  %s1 = inlined_call_operand.vmem [shape: bf16[16,8], index: 1, kind: input, shape index: {}]
  %s2 = inlined_call_operand.vmem [shape: bf16[16,128], index: 2, kind: input, shape index: {}]
  %s3 = inlined_call_operand.hbm [shape: bf16[128,128], index: 3, kind: input, shape index: {}]
  %s4 = inlined_call_operand.vmem [shape: f32[1,128], index: 4, kind: input, shape index: {}]
  %s5 = inlined_call_operand.hbm [shape: bf16[128,128], index: 5, kind: input, shape index: {}]
  %s6 = inlined_call_operand.vmem [shape: f32[1,128], index: 6, kind: input, shape index: {}]
  %s7 = inlined_call_operand.hbm [shape: bf16[16,128], index: 7, kind: output, shape index: {}]
  %s8 = sld [smem:[#allocation0]]
  $region69: #{tpu_custom_call.1} parent=0
    _
  %s10 = ssub.s32 1, %s8
  %s11 = scalar_select 0, %s10, %s8
  %12 = sst [smem:[#allocation2]] %s0
  $region1: #{tpu_custom_call.1} parent=0
    #allocation3 [shape = 'u8[32768]{0}', space=vmem, size = 0x8000, scoped, tag = 'input window, operand 3, single buffered']
    #allocation4 [shape = 's32[2]{0}', space=sflag, size = 0x8, scoped, tag = 'scoped memory for tpu_custom_call.1']
    #allocation5 [shape = 's32[2]{0}', space=sflag, size = 0x8, scoped, tag = 'scoped memory for tpu_custom_call.1']
    #allocation6 [shape = 'u8[32768]{0}', space=vmem, size = 0x8000, scoped, tag = 'input window, operand 5, single buffered']
    #allocation7 [shape = 's32[1]{0}', space=sflag, size = 0x4, scoped, tag = 'scoped memory for tpu_custom_call.1']
    #allocation8 [shape = 'u8[4096]{0}', space=vmem, size = 0x1000, scoped, tag = 'output window, operand 0']
    %13 = vsyncpa [#allocation4], 0
    %14 = vsyncpa [#allocation7], 0
    %15 = vsyncpa [#allocation5], 0
    %s16 = scalar_lea.sflag [#allocation5], 1
    %17 = vsyncpa %s16, 0
    loop: start=0, step=1, limit=4
    $region2: #{tpu_custom_call.1} parent=1 // loop_pre_header
      _
    $region3: #{tpu_custom_call.1} parent=1 // loop_header
      %s19 = sphi 0, %s23
      %p20 = scmp.ge.s32.totalorder %s19, 4
      %s27 = sphi 0, %s27
      %s29 = sphi 0, %s27
      %s30 = sphi 0, %s29
      %s44 = sphi 0, %s30
      %s50 = sphi 0, %s52
      %s53 = sphi 0, %s50
      %s54 = sphi 0, %s53
      %s70 = sphi 0, %s54
      %s76 = sphi 0, %s78
      %s79 = sphi 0, %s76
      %s80 = sphi 0, %s79
      %s96 = sphi 0, %s80
      %s100 = sphi 0, %s100
      %s102 = sphi 0, %s100
      %s103 = sphi 0, %s102
      %s117 = sphi 0, %s103
      %s121 = sphi 0, %s121
      %s123 = sphi 0, %s121
      %s124 = sphi 0, %s123
      %s138 = sphi 0, %s124
      %s142 = sphi 0, %s142
      %s144 = sphi 0, %s142
      %s145 = sphi 0, %s144
      %s159 = sphi 0, %s145
      %s163 = sphi 0, %s163
      %s165 = sphi 0, %s163
      %s166 = sphi 0, %s165
      %s180 = sphi 0, %s166
      %s186 = sphi 0, %s188
      %s189 = sphi 0, %s186
      %s190 = sphi 0, %s189
      %s206 = sphi 0, %s190
    $region4: #{tpu_custom_call.1} parent=1 // loop_header_branch
      %22 = sbr.rel (%p20) target = $region8
    $region5: #{tpu_custom_call.1} parent=1 // loop_body
      %s24 = ssub.s32 %s19, 1
      %s25 = ssub.s32 %s19, 2
      %s26 = sadd.s32 %s19, 1
      %s28 = sadd.s32 %s27, 1
      %p31 = scmp.eq.s32.totalorder %s19, 1
      %p32 = scmp.ne.s32.totalorder %s27, %s29
      %p33 = scmp.eq.s32.totalorder %s19, 0
      %p34 = por %p32, %p33
      %p35 = scmp.ne.s32.totalorder %s27, %s29
      %p36 = scmp.eq.s32.totalorder %s24, 1
      %p37 = por %p35, %p36
      %p38 = scmp.ne.s32.totalorder %s29, %s30
      %p39 = scmp.eq.s32.totalorder %s24, 0
      %p40 = por %p38, %p39
      %p41 = scmp.ne.s32.totalorder %s29, %s30
      %p42 = scmp.eq.s32.totalorder %s25, 1
      %p43 = por %p41, %p42
      %p45 = scmp.ne.s32.totalorder %s30, %s44
      %p46 = scmp.eq.s32.totalorder %s25, 0
      %p47 = por %p45, %p46
      %s48 = ssub.s32 %s19, %s26
      %p49 = scmp.eq.s32.totalorder %s48, 0
      %s51 = sadd.s32 %s50, 1
      %s52 = scalar_select %p49, %s50, %s51
      %p55 = pneg %p49
      %p56 = scmp.eq.s32.totalorder %s19, 1
      %p57 = por %p55, %p56
      %p58 = scmp.ne.s32.totalorder %s50, %s53
      %p59 = scmp.eq.s32.totalorder %s19, 0
      %p60 = por %p58, %p59
      %p61 = scmp.ne.s32.totalorder %s50, %s53
      %p62 = scmp.eq.s32.totalorder %s24, 1
      %p63 = por %p61, %p62
      %p64 = scmp.ne.s32.totalorder %s53, %s54
      %p65 = scmp.eq.s32.totalorder %s24, 0
      %p66 = por %p64, %p65
      %p67 = scmp.ne.s32.totalorder %s53, %s54
      %p68 = scmp.eq.s32.totalorder %s25, 1
      %p69 = por %p67, %p68
      %p71 = scmp.ne.s32.totalorder %s54, %s70
      %p72 = scmp.eq.s32.totalorder %s25, 0
      %p73 = por %p71, %p72
      %s74 = ssub.s32 %s19, %s26
      %p75 = scmp.eq.s32.totalorder %s74, 0
      %s77 = sadd.s32 %s76, 1
      %s78 = scalar_select %p75, %s76, %s77
      %p81 = pneg %p75
      %p82 = scmp.eq.s32.totalorder %s19, 1
      %p83 = por %p81, %p82
      %p84 = scmp.ne.s32.totalorder %s76, %s79
      %p85 = scmp.eq.s32.totalorder %s19, 0
      %p86 = por %p84, %p85
      %p87 = scmp.ne.s32.totalorder %s76, %s79
      %p88 = scmp.eq.s32.totalorder %s24, 1
      %p89 = por %p87, %p88
      %p90 = scmp.ne.s32.totalorder %s79, %s80
      %p91 = scmp.eq.s32.totalorder %s24, 0
      %p92 = por %p90, %p91
      %p93 = scmp.ne.s32.totalorder %s79, %s80
      %p94 = scmp.eq.s32.totalorder %s25, 1
      %p95 = por %p93, %p94
      %p97 = scmp.ne.s32.totalorder %s80, %s96
      %p98 = scmp.eq.s32.totalorder %s25, 0
      %p99 = por %p97, %p98
      %s101 = sadd.s32 %s100, 1
      %p104 = scmp.eq.s32.totalorder %s19, 1
      %p105 = scmp.ne.s32.totalorder %s100, %s102
      %p106 = scmp.eq.s32.totalorder %s19, 0
      %p107 = por %p105, %p106
      %p108 = scmp.ne.s32.totalorder %s100, %s102
      %p109 = scmp.eq.s32.totalorder %s24, 1
      %p110 = por %p108, %p109
      %p111 = scmp.ne.s32.totalorder %s102, %s103
      %p112 = scmp.eq.s32.totalorder %s24, 0
      %p113 = por %p111, %p112
      %p114 = scmp.ne.s32.totalorder %s102, %s103
      %p115 = scmp.eq.s32.totalorder %s25, 1
      %p116 = por %p114, %p115
      %p118 = scmp.ne.s32.totalorder %s103, %s117
      %p119 = scmp.eq.s32.totalorder %s25, 0
      %p120 = por %p118, %p119
      %s122 = sadd.s32 %s121, 1
      %p125 = scmp.eq.s32.totalorder %s19, 1
      %p126 = scmp.ne.s32.totalorder %s121, %s123
      %p127 = scmp.eq.s32.totalorder %s19, 0
      %p128 = por %p126, %p127
      %p129 = scmp.ne.s32.totalorder %s121, %s123
      %p130 = scmp.eq.s32.totalorder %s24, 1
      %p131 = por %p129, %p130
      %p132 = scmp.ne.s32.totalorder %s123, %s124
      %p133 = scmp.eq.s32.totalorder %s24, 0
      %p134 = por %p132, %p133
      %p135 = scmp.ne.s32.totalorder %s123, %s124
      %p136 = scmp.eq.s32.totalorder %s25, 1
      %p137 = por %p135, %p136
      %p139 = scmp.ne.s32.totalorder %s124, %s138
      %p140 = scmp.eq.s32.totalorder %s25, 0
      %p141 = por %p139, %p140
      %s143 = sadd.s32 %s142, 1
      %p146 = scmp.eq.s32.totalorder %s19, 1
      %p147 = scmp.ne.s32.totalorder %s142, %s144
      %p148 = scmp.eq.s32.totalorder %s19, 0
      %p149 = por %p147, %p148
      %p150 = scmp.ne.s32.totalorder %s142, %s144
      %p151 = scmp.eq.s32.totalorder %s24, 1
      %p152 = por %p150, %p151
      %p153 = scmp.ne.s32.totalorder %s144, %s145
      %p154 = scmp.eq.s32.totalorder %s24, 0
      %p155 = por %p153, %p154
      %p156 = scmp.ne.s32.totalorder %s144, %s145
      %p157 = scmp.eq.s32.totalorder %s25, 1
      %p158 = por %p156, %p157
      %p160 = scmp.ne.s32.totalorder %s145, %s159
      %p161 = scmp.eq.s32.totalorder %s25, 0
      %p162 = por %p160, %p161
      %s164 = sadd.s32 %s163, 1
      %p167 = scmp.eq.s32.totalorder %s19, 1
      %p168 = scmp.ne.s32.totalorder %s163, %s165
      %p169 = scmp.eq.s32.totalorder %s19, 0
      %p170 = por %p168, %p169
      %p171 = scmp.ne.s32.totalorder %s163, %s165
      %p172 = scmp.eq.s32.totalorder %s24, 1
      %p173 = por %p171, %p172
      %p174 = scmp.ne.s32.totalorder %s165, %s166
      %p175 = scmp.eq.s32.totalorder %s24, 0
      %p176 = por %p174, %p175
      %p177 = scmp.ne.s32.totalorder %s165, %s166
      %p178 = scmp.eq.s32.totalorder %s25, 1
      %p179 = por %p177, %p178
      %p181 = scmp.ne.s32.totalorder %s166, %s180
      %p182 = scmp.eq.s32.totalorder %s25, 0
      %p183 = por %p181, %p182
      %s184 = ssub.s32 %s19, %s26
      %p185 = scmp.eq.s32.totalorder %s184, 0
      %s187 = sadd.s32 %s186, 1
      %s188 = scalar_select %p185, %s186, %s187
      %p191 = pneg %p185
      %p192 = scmp.eq.s32.totalorder %s19, 1
      %p193 = por %p191, %p192
      %p194 = scmp.ne.s32.totalorder %s186, %s189
      %p195 = scmp.eq.s32.totalorder %s19, 0
      %p196 = por %p194, %p195
      %p197 = scmp.ne.s32.totalorder %s186, %s189
      %p198 = scmp.eq.s32.totalorder %s24, 1
      %p199 = por %p197, %p198
      %p200 = scmp.ne.s32.totalorder %s189, %s190
      %p201 = scmp.eq.s32.totalorder %s24, 0
      %p202 = por %p200, %p201
      %p203 = scmp.ne.s32.totalorder %s189, %s190
      %p204 = scmp.eq.s32.totalorder %s25, 1
      %p205 = por %p203, %p204
      %p207 = scmp.ne.s32.totalorder %s190, %s206
      %p208 = scmp.eq.s32.totalorder %s25, 0
      %p209 = por %p207, %p208
      %p210 = scmp.le.s32.totalorder 1, %s19
      %p211 = scmp.lt.s32.totalorder %s19, 3
      %p212 = pnand %p210, %p211
      %p213 = pneg %p212
      // Predicated region
      $region9: #{tpu_custom_call.1} parent=5 // pred_check
        _
      $region10: #{tpu_custom_call.1} parent=5 // pred_check_branch
        %215 = sbr.rel (%p212) target = $region12
      $region11: #{tpu_custom_call.1} parent=5 // pred_region
        %s216 = ssub.s32 %s19, 1
        // Predicated region
        $region13: #{tpu_custom_call.1} parent=11 // pred_check
          %p217 = pneg %p40
        $region14: #{tpu_custom_call.1} parent=11 // pred_check_branch
          %219 = sbr.rel (%p217) target = $region16
        $region15: #{tpu_custom_call.1} parent=11 // pred_region
          _
        $region16: #{tpu_custom_call.1} parent=11 // pred_fallthru
          _
        // Predicated region
        $region17: #{tpu_custom_call.1} parent=11 // pred_check
          %p220 = pneg %p113
        $region18: #{tpu_custom_call.1} parent=11 // pred_check_branch
          %222 = sbr.rel (%p220) target = $region20
        $region19: #{tpu_custom_call.1} parent=11 // pred_region
          %s224 = ssub.s32 1024, 1024
          %225 = vsyncadd [#allocation4], %s224
          %s226 = sshll.u32 [#allocation3], 4
          %s227 = int_to_ptr.vmem [resolvable:$true] %s226
          %232 = dma.hbm_to_vmem [thread:$0]  %s3, 1024, %s227, [#allocation4], 64, 64, 4
        $region20: #{tpu_custom_call.1} parent=11 // pred_fallthru
          _
        // Predicated region
        $region21: #{tpu_custom_call.1} parent=11 // pred_check
          %p233 = pneg %p134
        $region22: #{tpu_custom_call.1} parent=11 // pred_check_branch
          %235 = sbr.rel (%p233) target = $region24
        $region23: #{tpu_custom_call.1} parent=11 // pred_region
          _
        $region24: #{tpu_custom_call.1} parent=11 // pred_fallthru
          _
        // Predicated region
        $region25: #{tpu_custom_call.1} parent=11 // pred_check
          %p236 = pneg %p155
        $region26: #{tpu_custom_call.1} parent=11 // pred_check_branch
          %238 = sbr.rel (%p236) target = $region28
        $region27: #{tpu_custom_call.1} parent=11 // pred_region
          %s240 = ssub.s32 1024, 1024
          %241 = vsyncadd [#allocation7], %s240
          %s242 = sshll.u32 [#allocation6], 4
          %s243 = int_to_ptr.vmem [resolvable:$true] %s242
          %248 = dma.hbm_to_vmem [thread:$0]  %s5, 1024, %s243, [#allocation7], 64, 64, 4
        $region28: #{tpu_custom_call.1} parent=11 // pred_fallthru
          _
        // Predicated region
        $region29: #{tpu_custom_call.1} parent=11 // pred_check
          %p249 = pneg %p176
        $region30: #{tpu_custom_call.1} parent=11 // pred_check_branch
          %251 = sbr.rel (%p249) target = $region32
        $region31: #{tpu_custom_call.1} parent=11 // pred_region
          _
        $region32: #{tpu_custom_call.1} parent=11 // pred_fallthru
          _
      $region12: #{tpu_custom_call.1} parent=5 // pred_fallthru
        _
      %p252 = scmp.lt.s32.totalorder %s19, 2
      // Predicated region
      $region33: #{tpu_custom_call.1} parent=5 // pred_check
        %p253 = pneg %p252
      $region34: #{tpu_custom_call.1} parent=5 // pred_check_branch
        %255 = sbr.rel (%p253) target = $region36
      $region35: #{tpu_custom_call.1} parent=5 // pred_region
        // Predicated region
        $region37: #{tpu_custom_call.1} parent=35 // pred_check
          %p256 = pneg %p60
        $region38: #{tpu_custom_call.1} parent=35 // pred_check_branch
          %258 = sbr.rel (%p256) target = $region40
        $region39: #{tpu_custom_call.1} parent=35 // pred_region
          %p259 = scmp.lt.s32.totalorder %s19, 1
          %s260 = scalar_select %p259, %s19, 1
          %s261 = smul.addr %s260, 4
          %s262 = scalar_lea.vmem %s1, %s261
        $region40: #{tpu_custom_call.1} parent=35 // pred_fallthru
          _
        // Predicated region
        $region41: #{tpu_custom_call.1} parent=35 // pred_check
          %p263 = pneg %p86
        $region42: #{tpu_custom_call.1} parent=35 // pred_check_branch
          %265 = sbr.rel (%p263) target = $region44
        $region43: #{tpu_custom_call.1} parent=35 // pred_region
          %p266 = scmp.lt.s32.totalorder %s19, 1
          %s267 = scalar_select %p266, %s19, 1
          %s268 = smul.addr %s267, 4
          %s269 = scalar_lea.vmem %s2, %s268
        $region44: #{tpu_custom_call.1} parent=35 // pred_fallthru
          _
      $region36: #{tpu_custom_call.1} parent=5 // pred_fallthru
        _
      %p270 = scmp.le.s32.totalorder 1, %s19
      %p271 = scmp.lt.s32.totalorder %s19, 3
      %p272 = pnand %p270, %p271
      %p273 = pneg %p272
      // Predicated region
      $region45: #{tpu_custom_call.1} parent=5 // pred_check
        _
      $region46: #{tpu_custom_call.1} parent=5 // pred_check_branch
        %275 = sbr.rel (%p272) target = $region48
      $region47: #{tpu_custom_call.1} parent=5 // pred_region
        %s276 = ssub.s32 %s19, 1
        // Predicated region
        $region49: #{tpu_custom_call.1} parent=47 // pred_check
          %p277 = pneg %p113
        $region50: #{tpu_custom_call.1} parent=47 // pred_check_branch
          %279 = sbr.rel (%p277) target = $region52
        $region51: #{tpu_custom_call.1} parent=47 // pred_region
          %280 = dma.done [#allocation4], 1024
        $region52: #{tpu_custom_call.1} parent=47 // pred_fallthru
          _
        // Predicated region
        $region53: #{tpu_custom_call.1} parent=47 // pred_check
          %p281 = pneg %p155
        $region54: #{tpu_custom_call.1} parent=47 // pred_check_branch
          %283 = sbr.rel (%p281) target = $region56
        $region55: #{tpu_custom_call.1} parent=47 // pred_region
          %284 = dma.done [#allocation7], 1024
        $region56: #{tpu_custom_call.1} parent=47 // pred_fallthru
          _
        %p285 = pneg %p40
        %p286 = pneg %p37
        %p287 = scmp.lt.s32.totalorder %s24, 1
        %s288 = scalar_select %p287, %s24, 1
        %s289 = smul.addr %s288, 4
        %s290 = scalar_lea.vmem %s1, %s289
        %p291 = pneg %p66
        %p292 = pneg %p63
        %p293 = scmp.lt.s32.totalorder %s24, 1
        %s294 = scalar_select %p293, %s24, 1
        %s295 = smul.addr %s294, 4
        %s296 = scalar_lea.vmem %s2, %s295
        %p297 = pneg %p92
        %p298 = pneg %p89
        %p299 = pneg %p113
        %p300 = pneg %p110
        %p301 = pneg %p134
        %p302 = pneg %p131
        %p303 = pneg %p155
        %p304 = pneg %p152
        %p305 = pneg %p176
        %p306 = pneg %p173
        %p307 = pneg %p202
        %p308 = pneg %p199
        %s309 = sand.u32 %s189, 1
        %s310 = scalar_lea.sflag [#allocation5], %s309
        %s311 = sand.u32 %s189, 1
        %s312 = smul.addr %s311, 4
        %s313 = scalar_lea.vmem [#allocation8], %s312
        %p314 = scmp.lt.s32.totalorder %s24, 1
        %s315 = scalar_select %p314, %s24, 1
        %s316 = smul.addr %s315, 4
        %s317 = scalar_lea.vmem %s1, %s316
        %p318 = scmp.lt.s32.totalorder %s24, 1
        %s319 = scalar_select %p318, %s24, 1
        %s320 = smul.addr %s319, 4
        %s321 = scalar_lea.vmem %s2, %s320
        %v323 = vld [vmem:[%s321] sm:$0xf]
        %v324 = vld [vmem:[%s317] sm:$0xf]
        %s325 = sld [smem:[#allocation2]]
        %v326 = vunpack.c.l.bf16 %v323
        %v327 = vstv %s325
        %v328 = vmul.f32 %v327, %v326
        %vm329 = vcmask 64512
        %v331 = vsel %vm329, %v324, 0
        %vm333 = vcmask 1043456
        %v335 = vsel %vm333, %v323, 0
        %337 = vmatprep.subr.bf16.mxu0 0
        %338 = vmatpush1.bf16.msra.mxu0 %v335
        %339 = vmatprep.subr.bf16.mxu0 0
        %340 = vmatpush1.bf16.msra.mxu0 0
        %341 = vmatprep.subr.bf16.mxu0 0
        %342 = vmatpush1.bf16.msra.mxu0 0
        %343 = vmatprep.subr.bf16.mxu0 0
        %344 = vmatpush1.bf16.msra.mxu0 0
        %345 = vmatprep.subr.bf16.mxu0 0
        %346 = vmatpush1.bf16.msra.mxu0 0
        %347 = vmatprep.subr.bf16.mxu0 0
        %348 = vmatpush1.bf16.msra.mxu0 0
        %349 = vmatprep.subr.bf16.mxu0 0
        %350 = vmatpush1.bf16.msra.mxu0 0
        %351 = vmatprep.subr.bf16.mxu0 0
        %352 = vmatpush1.bf16.msra.mxu0 0
        %353 = vmatprep.subr.bf16.mxu0 0
        %354 = vmatpush1.bf16.msra.mxu0 0
        %355 = vmatprep.subr.bf16.mxu0 0
        %356 = vmatpush1.bf16.msra.mxu0 0
        %357 = vmatprep.subr.bf16.mxu0 0
        %358 = vmatpush1.bf16.msra.mxu0 0
        %359 = vmatprep.subr.bf16.mxu0 0
        %360 = vmatpush1.bf16.msra.mxu0 0
        %361 = vmatprep.subr.bf16.mxu0 0
        %362 = vmatpush1.bf16.msra.mxu0 0
        %363 = vmatprep.subr.bf16.mxu0 0
        %364 = vmatpush1.bf16.msra.mxu0 0
        %365 = vmatprep.subr.bf16.mxu0 0
        %366 = vmatpush1.bf16.msra.mxu0 0
        %367 = vmatprep.subr.bf16.mxu0 0
        %368 = vmatpush1.bf16.msra.mxu0 0
        %369 = vmatprep.mubr.bf16.mxu0 0
        %370 = vmatmul.mubr.bf16.gmra.mrb[0].mxu0 %v331
        %v371 = vpop.f32.mrb[0].mxu0
        %v372 = vadd.f32 %v328, %v371
        %v373 = vpop.f32.mrb[0].mxu0
        %v374 = vpop.f32.mrb[0].mxu0
        %v375 = vpop.f32.mrb[0].mxu0
        %376 = vdwg.mxu0
        %v377 = vpack.c.bf16 %v372, %v372
        %v378 = vld [vmem:[#allocation3] sm:$0xf]
        %v379 = vld [vmem:[#allocation3 + $0x4] sm:$0xf]
        %v380 = vld [vmem:[#allocation3 + $0x8] sm:$0xf]
        %v381 = vld [vmem:[#allocation3 + $0xc] sm:$0xf]
        %v382 = vld [vmem:[#allocation3 + $0x10] sm:$0xf]
        %v383 = vld [vmem:[#allocation3 + $0x14] sm:$0xf]
        %v384 = vld [vmem:[#allocation3 + $0x18] sm:$0xf]
        %v385 = vld [vmem:[#allocation3 + $0x1c] sm:$0xf]
        %v386 = vld [vmem:[#allocation3 + $0x20] sm:$0xf]
        %v387 = vld [vmem:[#allocation3 + $0x24] sm:$0xf]
        %v388 = vld [vmem:[#allocation3 + $0x28] sm:$0xf]
        %v389 = vld [vmem:[#allocation3 + $0x2c] sm:$0xf]
        %v390 = vld [vmem:[#allocation3 + $0x30] sm:$0xf]
        %v391 = vld [vmem:[#allocation3 + $0x34] sm:$0xf]
        %v392 = vld [vmem:[#allocation3 + $0x38] sm:$0xf]
        %v393 = vld [vmem:[#allocation3 + $0x3c] sm:$0xf]
        %v394 = vld [vmem:[%s4] sm:$0x1]
        %v396 = vlaneseq
        %v397 = vshrl.u32 %v396, 7
        %v398 = vsub.s32 0, %v397
        %v399 = vrot.slane %v394, %v398
        %v417 = vunpack.c.l.b16 %v378
        %v418 = vunpack.c.l.b16 %v379
        %v419 = vunpack.c.l.b16 %v380
        %v420 = vunpack.c.l.b16 %v381
        %v421 = vunpack.c.l.b16 %v382
        %v422 = vunpack.c.l.b16 %v383
        %v423 = vunpack.c.l.b16 %v384
        %v424 = vunpack.c.l.b16 %v385
        %v425 = vunpack.c.l.b16 %v386
        %v426 = vunpack.c.l.b16 %v387
        %v427 = vunpack.c.l.b16 %v388
        %v428 = vunpack.c.l.b16 %v389
        %v429 = vunpack.c.l.b16 %v390
        %v430 = vunpack.c.l.b16 %v391
        %v431 = vunpack.c.l.b16 %v392
        %v432 = vunpack.c.l.b16 %v393
        %v433 = vpack.c.b16 %v418, %v417
        %v434 = vpack.c.b16 %v420, %v419
        %v435 = vpack.c.b16 %v422, %v421
        %v436 = vpack.c.b16 %v424, %v423
        %v437 = vpack.c.b16 %v426, %v425
        %v438 = vpack.c.b16 %v428, %v427
        %v439 = vpack.c.b16 %v430, %v429
        %v440 = vpack.c.b16 %v432, %v431
        %449 = vmatprep.subr.bf16.mxu0 0
        %450 = vmatpush1.bf16.msra.mxu0 %v433
        %451 = vmatprep.subr.bf16.mxu0 0
        %452 = vmatpush1.bf16.msra.mxu0 %v434
        %453 = vmatprep.subr.bf16.mxu0 0
        %454 = vmatpush1.bf16.msra.mxu0 %v435
        %455 = vmatprep.subr.bf16.mxu0 0
        %456 = vmatpush1.bf16.msra.mxu0 %v436
        %457 = vmatprep.subr.bf16.mxu0 0
        %458 = vmatpush1.bf16.msra.mxu0 %v437
        %459 = vmatprep.subr.bf16.mxu0 0
        %460 = vmatpush1.bf16.msra.mxu0 %v438
        %461 = vmatprep.subr.bf16.mxu0 0
        %462 = vmatpush1.bf16.msra.mxu0 %v439
        %463 = vmatprep.subr.bf16.mxu0 0
        %464 = vmatpush1.bf16.msra.mxu0 %v440
        %465 = vmatprep.subr.bf16.mxu0 0
        %466 = vmatpush1.bf16.msra.mxu0 0
        %467 = vmatprep.subr.bf16.mxu0 0
        %468 = vmatpush1.bf16.msra.mxu0 0
        %469 = vmatprep.subr.bf16.mxu0 0
        %470 = vmatpush1.bf16.msra.mxu0 0
        %471 = vmatprep.subr.bf16.mxu0 0
        %472 = vmatpush1.bf16.msra.mxu0 0
        %473 = vmatprep.subr.bf16.mxu0 0
        %474 = vmatpush1.bf16.msra.mxu0 0
        %475 = vmatprep.subr.bf16.mxu0 0
        %476 = vmatpush1.bf16.msra.mxu0 0
        %477 = vmatprep.subr.bf16.mxu0 0
        %478 = vmatpush1.bf16.msra.mxu0 0
        %479 = vmatprep.subr.bf16.mxu0 0
        %480 = vmatpush1.bf16.msra.mxu0 0
        %481 = vmatprep.mubr.bf16.mxu0 0
        %482 = vmatmul.mubr.bf16.gmra.mrb[0].mxu0 %v377
        %v483 = vpop.f32.mrb[0].mxu0
        %v484 = vadd.f32 %v399, %v483
        %v485 = vpop.f32.mrb[0].mxu0
        %v486 = vpop.f32.mrb[0].mxu0
        %v487 = vpop.f32.mrb[0].mxu0
        %488 = vdwg.mxu0
        %v489 = vmax.f32 %v484, 0.0
        %v490 = vpack.c.bf16 %v489, %v489
        %v491 = vld [vmem:[#allocation6] sm:$0xf]
        %v492 = vld [vmem:[#allocation6 + $0x4] sm:$0xf]
        %v493 = vld [vmem:[#allocation6 + $0x8] sm:$0xf]
        %v494 = vld [vmem:[#allocation6 + $0xc] sm:$0xf]
        %v495 = vld [vmem:[#allocation6 + $0x10] sm:$0xf]
        %v496 = vld [vmem:[#allocation6 + $0x14] sm:$0xf]
        %v497 = vld [vmem:[#allocation6 + $0x18] sm:$0xf]
        %v498 = vld [vmem:[#allocation6 + $0x1c] sm:$0xf]
        %v499 = vld [vmem:[#allocation6 + $0x20] sm:$0xf]
        %v500 = vld [vmem:[#allocation6 + $0x24] sm:$0xf]
        %v501 = vld [vmem:[#allocation6 + $0x28] sm:$0xf]
        %v502 = vld [vmem:[#allocation6 + $0x2c] sm:$0xf]
        %v503 = vld [vmem:[#allocation6 + $0x30] sm:$0xf]
        %v504 = vld [vmem:[#allocation6 + $0x34] sm:$0xf]
        %v505 = vld [vmem:[#allocation6 + $0x38] sm:$0xf]
        %v506 = vld [vmem:[#allocation6 + $0x3c] sm:$0xf]
        %v507 = vld [vmem:[%s6] sm:$0x1]
        %v509 = vlaneseq
        %v510 = vshrl.u32 %v509, 7
        %v511 = vsub.s32 0, %v510
        %v512 = vrot.slane %v507, %v511
        %v530 = vunpack.c.l.b16 %v491
        %v531 = vunpack.c.l.b16 %v492
        %v532 = vunpack.c.l.b16 %v493
        %v533 = vunpack.c.l.b16 %v494
        %v534 = vunpack.c.l.b16 %v495
        %v535 = vunpack.c.l.b16 %v496
        %v536 = vunpack.c.l.b16 %v497
        %v537 = vunpack.c.l.b16 %v498
        %v538 = vunpack.c.l.b16 %v499
        %v539 = vunpack.c.l.b16 %v500
        %v540 = vunpack.c.l.b16 %v501
        %v541 = vunpack.c.l.b16 %v502
        %v542 = vunpack.c.l.b16 %v503
        %v543 = vunpack.c.l.b16 %v504
        %v544 = vunpack.c.l.b16 %v505
        %v545 = vunpack.c.l.b16 %v506
        %v546 = vpack.c.b16 %v531, %v530
        %v547 = vpack.c.b16 %v533, %v532
        %v548 = vpack.c.b16 %v535, %v534
        %v549 = vpack.c.b16 %v537, %v536
        %v550 = vpack.c.b16 %v539, %v538
        %v551 = vpack.c.b16 %v541, %v540
        %v552 = vpack.c.b16 %v543, %v542
        %v553 = vpack.c.b16 %v545, %v544
        %562 = vmatprep.subr.bf16.mxu0 0
        %563 = vmatpush1.bf16.msra.mxu0 %v546
        %564 = vmatprep.subr.bf16.mxu0 0
        %565 = vmatpush1.bf16.msra.mxu0 %v547
        %566 = vmatprep.subr.bf16.mxu0 0
        %567 = vmatpush1.bf16.msra.mxu0 %v548
        %568 = vmatprep.subr.bf16.mxu0 0
        %569 = vmatpush1.bf16.msra.mxu0 %v549
        %570 = vmatprep.subr.bf16.mxu0 0
        %571 = vmatpush1.bf16.msra.mxu0 %v550
        %572 = vmatprep.subr.bf16.mxu0 0
        %573 = vmatpush1.bf16.msra.mxu0 %v551
        %574 = vmatprep.subr.bf16.mxu0 0
        %575 = vmatpush1.bf16.msra.mxu0 %v552
        %576 = vmatprep.subr.bf16.mxu0 0
        %577 = vmatpush1.bf16.msra.mxu0 %v553
        %578 = vmatprep.subr.bf16.mxu0 0
        %579 = vmatpush1.bf16.msra.mxu0 0
        %580 = vmatprep.subr.bf16.mxu0 0
        %581 = vmatpush1.bf16.msra.mxu0 0
        %582 = vmatprep.subr.bf16.mxu0 0
        %583 = vmatpush1.bf16.msra.mxu0 0
        %584 = vmatprep.subr.bf16.mxu0 0
        %585 = vmatpush1.bf16.msra.mxu0 0
        %586 = vmatprep.subr.bf16.mxu0 0
        %587 = vmatpush1.bf16.msra.mxu0 0
        %588 = vmatprep.subr.bf16.mxu0 0
        %589 = vmatpush1.bf16.msra.mxu0 0
        %590 = vmatprep.subr.bf16.mxu0 0
        %591 = vmatpush1.bf16.msra.mxu0 0
        %592 = vmatprep.subr.bf16.mxu0 0
        %593 = vmatpush1.bf16.msra.mxu0 0
        %594 = vmatprep.mubr.bf16.mxu0 0
        %595 = vmatmul.mubr.bf16.gmra.mrb[0].mxu0 %v490
        %v596 = vpop.f32.mrb[0].mxu0
        %v597 = vadd.f32 %v512, %v596
        %v598 = vpop.f32.mrb[0].mxu0
        %v599 = vpop.f32.mrb[0].mxu0
        %v600 = vpop.f32.mrb[0].mxu0
        %601 = vdwg.mxu0
        %v602 = vmax.f32 %v597, 0.0
        %v603 = vpack.c.bf16 %v602, %v602
        %604 = vst [vmem:[%s313] sm:$0xf] %v603
        %s605 = sand.u32 %s189, 1
        %s606 = scalar_lea.sflag [#allocation5], %s605
        %s607 = sand.u32 %s189, 1
        %s608 = smul.addr %s607, 4
        %s609 = scalar_lea.vmem [#allocation8], %s608
        // Predicated region
        $region57: #{tpu_custom_call.1} parent=47 // pred_check
          %p610 = pneg %p199
        $region58: #{tpu_custom_call.1} parent=47 // pred_check_branch
          %612 = sbr.rel (%p610) target = $region60
        $region59: #{tpu_custom_call.1} parent=47 // pred_region
          %s614 = ssub.s32 64, 64
          %615 = vsyncadd %s606, %s614
          %s616 = smul.addr %s24, 64
          %s617 = scalar_lea.hbm %s7, %s616
          %s619 = sshll.u32 %s609, 4
          %s620 = int_to_ptr.vmem [resolvable:$true] %s619
          %622 = dma.vmem_to_hbm [thread:$0]  %s620, 64, %s617, %s606
        $region60: #{tpu_custom_call.1} parent=47 // pred_fallthru
          _
      $region48: #{tpu_custom_call.1} parent=5 // pred_fallthru
        _
      %p623 = scmp.le.s32.totalorder 2, %s19
      // Predicated region
      $region61: #{tpu_custom_call.1} parent=5 // pred_check
        %p624 = pneg %p623
      $region62: #{tpu_custom_call.1} parent=5 // pred_check_branch
        %626 = sbr.rel (%p624) target = $region64
      $region63: #{tpu_custom_call.1} parent=5 // pred_region
        %s627 = ssub.s32 %s19, 2
        // Predicated region
        $region65: #{tpu_custom_call.1} parent=63 // pred_check
          %p628 = pneg %p205
        $region66: #{tpu_custom_call.1} parent=63 // pred_check_branch
          %630 = sbr.rel (%p628) target = $region68
        $region67: #{tpu_custom_call.1} parent=63 // pred_region
          %s631 = sand.u32 %s190, 1
          %s632 = scalar_lea.sflag [#allocation5], %s631
          %s633 = sand.u32 %s190, 1
          %s634 = smul.addr %s633, 4
          %s635 = scalar_lea.vmem [#allocation8], %s634
          %636 = dma.done %s632, 64
        $region68: #{tpu_custom_call.1} parent=63 // pred_fallthru
          _
      $region64: #{tpu_custom_call.1} parent=5 // pred_fallthru
        _
    $region6: #{tpu_custom_call.1} parent=1 // loop_footer
      %s23 = sadd.s32 1, %s19
    $region7: #{tpu_custom_call.1} parent=1 // loop_footer_branch
      %18 = sbr.rel target = $region3
    $region8: #{tpu_custom_call.1} parent=1 // loop_exit
      _
    %637 = vsyncpa [#allocation4], 1
    %s638 = scalar_lea.sflag [#allocation4], 1
    %639 = vsyncpa %s638, 1
    %640 = vsyncpa [#allocation7], 1
    %641 = vsyncpa [#allocation5], 1
    %s642 = scalar_lea.sflag [#allocation5], 1
    %643 = vsyncpa %s642, 1

</llo_original>
